<compile_context>
chip_gen: v6e
topology: v6e:2x2x1
jax: 0.10.0
libtpu: 0.0.40
codegen_flags: <defaults>
</compile_context>

<pallas_src>
import jax
import jax.numpy as jnp
from jax.experimental import pallas as pl
from jax.experimental.pallas import tpu as pltpu


def _round_up(x, m):
    return (x + m - 1) // m * m


def _vmem_budget_bytes():
    """Generation-aware VMEM budget with headroom.

    ~96 MiB on 128 MiB parts (v5e/v6e), ~48 MiB on v7x (64 MiB per TC).
    """
    cap = 64 * 1024 * 1024  # assume smallest (v7x per-TC) if query fails
    try:
        info = pltpu.get_tpu_info()
        cap = int(getattr(info, "vmem_capacity_bytes", cap))
    except Exception:
        pass
    return int(min(cap * 3 // 4, 100 * 1024 * 1024))


def make_plan(N, K, F):
    """Choose tile sizes, padding and x residency against the VMEM budget."""
    budget = _vmem_budget_bytes()

    def footprint(tk, tf, kp, x_res):
        x_b = 2 * N * (kp if x_res else tk) * 2   # bf16 (conservatively x2)
        w_b = 2 * tk * tf * 2                      # bf16 W tile, double-buffered
        o_b = 2 * N * tf * 4                       # f32 output block
        gb_b = 2 * 2 * tf * 4                      # gamma / beta rows
        return x_b + w_b + o_b + gb_b

    plan = None
    for cand in (512, 256, 128):
        tk = min(cand, _round_up(K, 128))
        tf = min(cand, _round_up(F, 128))
        kp = _round_up(K, tk)
        fp = _round_up(F, tf)
        # Prefer >= 2 (even) F blocks so v7x megacore can split the F axis.
        if fp // tf == 1 and fp % 256 == 0:
            tf = fp // 2
        x_res = 2 * N * kp * 2 * 3 <= budget       # resident x if it is cheap
        plan = dict(N=N, K=K, F=F, TK=tk, TF=tf, Kp=kp, Fp=fp,
                    x_resident=x_res, vmem_limit_bytes=budget)
        if footprint(tk, tf, kp, x_res) <= budget:
            break
    return plan


def prepare_params(w, gamma, beta, plan):
    """One-time (out of hot path) pad / transpose / bf16-cast of parameters."""
    K, F, Kp, Fp = plan["K"], plan["F"], plan["Kp"], plan["Fp"]
    w_t = jnp.pad(w.astype(jnp.float32).T, ((0, Kp - K), (0, Fp - F)))
    w_t = w_t.astype(jnp.bfloat16)
    gamma_p = jnp.pad(gamma.astype(jnp.float32).reshape(1, -1),
                      ((0, 0), (0, Fp - F)))
    beta_p = jnp.pad(beta.astype(jnp.float32).reshape(1, -1),
                     ((0, 0), (0, Fp - F)))
    return w_t, gamma_p, beta_p


def _make_kernel(x_resident, tk):
    def kernel(x_ref, w_ref, gamma_ref, beta_ref, o_ref):
        # Grid = (F tiles, K tiles); K innermost (reduction).
        k = pl.program_id(1)

        if x_resident:
            start = pl.multiple_of(k * tk, tk)
            x_blk = x_ref[:, pl.ds(start, tk)]     # slice resident x in VMEM
        else:
            x_blk = x_ref[...]                     # streamed (N, TK) tile

        prod = jnp.dot(x_blk, w_ref[...], preferred_element_type=jnp.float32)

        @pl.when(k == 0)
        def _():
            o_ref[...] = prod                      # no zero-init + load-add

        @pl.when(k > 0)
        def _():
            o_ref[...] += prod                     # output-stationary accum

        # BatchNorm1d (training mode) epilogue, in place on o_ref, last K step.
        @pl.when(k == pl.num_programs(1) - 1)
        def _():
            y = o_ref[...]                                   # (N, TF) f32
            mean = jnp.mean(y, axis=0, keepdims=True)
            c = y - mean
            var = jnp.mean(c * c, axis=0, keepdims=True)     # biased variance
            scale = gamma_ref[...] * jax.lax.rsqrt(var + 1e-5)
            o_ref[...] = c * scale + beta_ref[...]

    return kernel


def fc_layer_forward(x, params, plan):
    """x: [N, K] f32 -> [N, F] f32 (Linear + training-mode BatchNorm1d)."""
    w_t, gamma, beta = params
    N, K = x.shape
    F, Kp, Fp = plan["F"], plan["Kp"], plan["Fp"]
    TK, TF = plan["TK"], plan["TF"]
    x_res = plan["x_resident"]

    # Only x's K dim is padded in the hot path (exact: extra columns are zero).
    xq = jnp.pad(x, ((0, 0), (0, Kp - K))) if Kp != K else x
    xq = xq.astype(jnp.bfloat16)

    grid = (Fp // TF, Kp // TK)

    if x_res:
        x_spec = pl.BlockSpec((N, Kp), lambda j, k: (0, 0))   # DMA'd once
        x_bytes = N * Kp * 2
    else:
        x_spec = pl.BlockSpec((N, TK), lambda j, k: (0, k))   # re-streamed / F tile
        x_bytes = (Fp // TF) * N * Kp * 2

    out = pl.pallas_call(
        _make_kernel(x_res, TK),
        out_shape=jax.ShapeDtypeStruct((N, Fp), jnp.float32),
        grid_spec=pltpu.PrefetchScalarGridSpec(
            num_scalar_prefetch=0,
            grid=grid,
            in_specs=[
                x_spec,
                pl.BlockSpec((TK, TF), lambda j, k: (k, j)),  # W tile (bf16)
                pl.BlockSpec((1, TF), lambda j, k: (0, j)),   # gamma row
                pl.BlockSpec((1, TF), lambda j, k: (0, j)),   # beta row
            ],
            out_specs=pl.BlockSpec((N, TF), lambda j, k: (0, j)),
        ),
        compiler_params=pltpu.CompilerParams(
            dimension_semantics=("parallel", "arbitrary"),
            vmem_limit_bytes=plan["vmem_limit_bytes"],
        ),
        cost_estimate=pl.CostEstimate(
            flops=2 * N * Kp * Fp,
            transcendentals=Fp,                               # one rsqrt / feature
            bytes_accessed=x_bytes + Kp * Fp * 2 + N * Fp * 4,
        ),
    )(xq, w_t, gamma, beta)

    return out[:, :F]


if __name__ == "__main__":
    # Small shapes consistent with FCLayer(input_size=32, output_size=16).
    batch, input_size, output_size = 8, 32, 16

    key = jax.random.PRNGKey(0)
    kx, kw, kb = jax.random.split(key, 3)

    # Parameter init mimicking nn.Linear's uniform(-1/sqrt(K), 1/sqrt(K)).
    bound = 1.0 / (input_size ** 0.5)
    w = jax.random.uniform(kw, (output_size, input_size), jnp.float32, -bound, bound)
    b = jax.random.uniform(kb, (output_size,), jnp.float32, -bound, bound)
    gamma = jnp.ones((output_size,), jnp.float32)   # BatchNorm1d weight init
    beta = jnp.zeros((output_size,), jnp.float32)   # BatchNorm1d bias init

    x = jax.random.normal(kx, (batch, input_size), jnp.float32)

    # One-time setup (out of the hot path): plan + padded/bf16 parameters.
    plan = make_plan(batch, input_size, output_size)
    params = prepare_params(w, gamma, beta, plan)

    out = fc_layer_forward(x, params, plan)
    out = jax.block_until_ready(out)

    # Reference in plain f32 JAX: Linear (WITH bias) + training-mode BN.
    # The bias is exactly cancelled by the mean subtraction; remaining
    # differences come only from bf16 MXU inputs.
    y_ref = x @ w.T + b
    mean = y_ref.mean(axis=0, keepdims=True)
    var = ((y_ref - mean) ** 2).mean(axis=0, keepdims=True)
    ref = (y_ref - mean) / jnp.sqrt(var + 1e-5) * gamma + beta

    assert out.shape == (batch, output_size), "bad output shape"
    assert jnp.allclose(out, ref, atol=2e-2, rtol=2e-2), "mismatch vs reference"

    print("KERNEL_OK")
</pallas_src>

<mosaic_0001>
module attributes {stable_mosaic.version = 11 : i64} {
  func.func @kernel(%arg0: i32, %arg1: i32, %arg2: memref<8x128xbf16, #tpu.memory_space<vmem>>, %arg3: memref<128x128xbf16, #tpu.memory_space<vmem>>, %arg4: memref<1x128xf32, #tpu.memory_space<vmem>>, %arg5: memref<1x128xf32, #tpu.memory_space<vmem>>, %arg6: memref<8x128xf32, #tpu.memory_space<vmem>>) attributes {dimension_semantics = [#tpu.dimension_semantics<parallel>, #tpu.dimension_semantics<arbitrary>], iteration_bounds = array<i64: 1, 1>, scalar_prefetch = 0 : i64, scratch_operands = 0 : i64, tpu.core_type = #tpu.core_type<tc>, window_params = [{pipeline_mode = #tpu.pipeline_mode<synchronous>, transform_indices = @transform_0, window_bounds = array<i64: 8, 128>}, {transform_indices = @transform_1, window_bounds = array<i64: 128, 128>}, {transform_indices = @transform_2, window_bounds = array<i64: 1, 128>}, {transform_indices = @transform_3, window_bounds = array<i64: 1, 128>}, {transform_indices = @transform_4, window_bounds = array<i64: 8, 128>}]} {
    %c128_i32 = arith.constant 128 : i32
    %0 = arith.muli %arg1, %c128_i32 : i32
    %1 = tpu.assume_multiple %0, 128 : i32
    %c0 = arith.constant 0 : index
    %2 = arith.index_cast %1 : i32 to index
    %3 = vector.load %arg2[%c0, %2] : memref<8x128xbf16, #tpu.memory_space<vmem>>, vector<8x128xbf16>
    %c0_0 = arith.constant 0 : index
    %c0_1 = arith.constant 0 : index
    %4 = vector.load %arg3[%c0_0, %c0_1] : memref<128x128xbf16, #tpu.memory_space<vmem>>, vector<128x128xbf16>
    %cst = arith.constant dense<0.000000e+00> : vector<8x128xf32>
    %5 = tpu.matmul %3, %4, %cst {dimension_numbers = #tpu.dot_dimension_numbers<[1], [0], [0], [1], [0, 0, 1, 1], [], []>} : vector<8x128xbf16>, vector<128x128xbf16>, vector<8x128xf32> -> vector<8x128xf32>
    %c0_i32 = arith.constant 0 : i32
    %6 = arith.cmpi eq, %arg1, %c0_i32 : i32
    %7 = arith.extui %6 : i1 to i32
    %c0_i32_2 = arith.constant 0 : i32
    %8 = arith.cmpi ne, %7, %c0_i32_2 : i32
    scf.if %8 {
      %c0_7 = arith.constant 0 : index
      %c0_8 = arith.constant 0 : index
      %15 = vector.load %arg6[%c0_7, %c0_8] : memref<8x128xf32, #tpu.memory_space<vmem>>, vector<8x128xf32>
      tpu.vector_store %arg6[%c0_7, %c0_8], %5 {strides = array<i32>} : memref<8x128xf32, #tpu.memory_space<vmem>>, vector<8x128xf32>,
    } else {
    }
    %c0_i32_3 = arith.constant 0 : i32
    %9 = arith.cmpi sgt, %arg1, %c0_i32_3 : i32
    %10 = arith.extui %9 : i1 to i32
    %c0_i32_4 = arith.constant 0 : i32
    %11 = arith.cmpi ne, %10, %c0_i32_4 : i32
    scf.if %11 {
      %c0_7 = arith.constant 0 : index
      %c0_8 = arith.constant 0 : index
      %15 = vector.load %arg6[%c0_7, %c0_8] : memref<8x128xf32, #tpu.memory_space<vmem>>, vector<8x128xf32>
      %16 = arith.addf %15, %5 : vector<8x128xf32>
      %c0_9 = arith.constant 0 : index
      %c0_10 = arith.constant 0 : index
      %17 = vector.load %arg6[%c0_9, %c0_10] : memref<8x128xf32, #tpu.memory_space<vmem>>, vector<8x128xf32>
      tpu.vector_store %arg6[%c0_9, %c0_10], %16 {strides = array<i32>} : memref<8x128xf32, #tpu.memory_space<vmem>>, vector<8x128xf32>,
    } else {
    }
    %c0_i32_5 = arith.constant 0 : i32
    %12 = arith.cmpi eq, %arg1, %c0_i32_5 : i32
    %13 = arith.extui %12 : i1 to i32
    %c0_i32_6 = arith.constant 0 : i32
    %14 = arith.cmpi ne, %13, %c0_i32_6 : i32
    scf.if %14 {
      %c0_7 = arith.constant 0 : index
      %c0_8 = arith.constant 0 : index
      %15 = vector.load %arg6[%c0_7, %c0_8] : memref<8x128xf32, #tpu.memory_space<vmem>>, vector<8x128xf32>
      %cst_9 = arith.constant dense<0.000000e+00> : vector<128xf32>
      %16 = vector.multi_reduction <add>, %15, %cst_9 [0] : vector<8x128xf32> to vector<128xf32>
      %17 = vector.shape_cast %16 : vector<128xf32> to vector<1x128xf32>
      %cst_10 = arith.constant 8.000000e+00 : f32
      %18 = vector.broadcast %cst_10 : f32 to vector<1x128xf32>
      %19 = arith.divf %17, %18 : vector<1x128xf32>
      %20 = vector.broadcast %19 : vector<1x128xf32> to vector<8x128xf32>
      %21 = arith.subf %15, %20 : vector<8x128xf32>
      %22 = arith.mulf %21, %21 : vector<8x128xf32>
      %cst_11 = arith.constant dense<0.000000e+00> : vector<128xf32>
      %23 = vector.multi_reduction <add>, %22, %cst_11 [0] : vector<8x128xf32> to vector<128xf32>
      %24 = vector.shape_cast %23 : vector<128xf32> to vector<1x128xf32>
      %cst_12 = arith.constant 8.000000e+00 : f32
      %25 = vector.broadcast %cst_12 : f32 to vector<1x128xf32>
      %26 = arith.divf %24, %25 : vector<1x128xf32>
      %c0_13 = arith.constant 0 : index
      %c0_14 = arith.constant 0 : index
      %27 = vector.load %arg4[%c0_13, %c0_14] : memref<1x128xf32, #tpu.memory_space<vmem>>, vector<1x128xf32>
      %cst_15 = arith.constant 9.99999974E-6 : f32
      %28 = vector.broadcast %cst_15 : f32 to vector<1x128xf32>
      %29 = arith.addf %26, %28 : vector<1x128xf32>
      %30 = math.rsqrt %29 : vector<1x128xf32>
      %31 = arith.mulf %27, %30 : vector<1x128xf32>
      %32 = vector.broadcast %31 : vector<1x128xf32> to vector<8x128xf32>
      %33 = arith.mulf %21, %32 : vector<8x128xf32>
      %c0_16 = arith.constant 0 : index
      %c0_17 = arith.constant 0 : index
      %34 = vector.load %arg5[%c0_16, %c0_17] : memref<1x128xf32, #tpu.memory_space<vmem>>, vector<1x128xf32>
      %35 = vector.broadcast %34 : vector<1x128xf32> to vector<8x128xf32>
      %36 = arith.addf %33, %35 : vector<8x128xf32>
      %c0_18 = arith.constant 0 : index
      %c0_19 = arith.constant 0 : index
      %37 = vector.load %arg6[%c0_18, %c0_19] : memref<8x128xf32, #tpu.memory_space<vmem>>, vector<8x128xf32>
      tpu.vector_store %arg6[%c0_18, %c0_19], %36 {strides = array<i32>} : memref<8x128xf32, #tpu.memory_space<vmem>>, vector<8x128xf32>,
    } else {
    }
    return
  }
  func.func @transform_0(%arg0: i32, %arg1: i32) -> (i32, i32) {
    %c0_i32 = arith.constant 0 : i32
    %c0_i32_0 = arith.constant 0 : i32
    %c0_i32_1 = arith.constant 0 : i32
    return %c0_i32, %c0_i32_0 : i32, i32
  }
  func.func @transform_1(%arg0: i32, %arg1: i32) -> (i32, i32) {
    %c0_i32 = arith.constant 0 : i32
    return %arg1, %arg0 : i32, i32
  }
  func.func @transform_2(%arg0: i32, %arg1: i32) -> (i32, i32) {
    %c0_i32 = arith.constant 0 : i32
    %c0_i32_0 = arith.constant 0 : i32
    return %c0_i32, %arg0 : i32, i32
  }
  func.func @transform_3(%arg0: i32, %arg1: i32) -> (i32, i32) {
    %c0_i32 = arith.constant 0 : i32
    %c0_i32_0 = arith.constant 0 : i32
    return %c0_i32, %arg0 : i32, i32
  }
  func.func @transform_4(%arg0: i32, %arg1: i32) -> (i32, i32) {
    %c0_i32 = arith.constant 0 : i32
    %c0_i32_0 = arith.constant 0 : i32
    return %c0_i32, %arg0 : i32, i32
  }
}

</mosaic_0001>

<llo_original>
// kernel: tpu_custom_call.1
$region0: #{tpu_custom_call.1}
  #allocation0 [shape = 'u32[]', space=smem, size = 0x4, offset = 0x4, fixed_abs, tag = 'smem constant byte address 0x4 - core index']
  #allocation1 [shape = 'u32[144,128]{1,0:T(1,128)}', space=vmem, size = 0x12000, scoped, tag = 'internal scratch']
  %s0 = inlined_call_operand.hbm [shape: bf16[8,128], index: 0, kind: input, shape index: {}]
  %s1 = inlined_call_operand.hbm [shape: bf16[128,128], index: 1, kind: input, shape index: {}]
  %s2 = inlined_call_operand.vmem [shape: f32[1,128], index: 2, kind: input, shape index: {}]
  %s3 = inlined_call_operand.vmem [shape: f32[1,128], index: 3, kind: input, shape index: {}]
  %s4 = inlined_call_operand.hbm [shape: f32[8,128], index: 4, kind: output, shape index: {}]
  %s5 = sld [smem:[#allocation0]]
  $region46: #{tpu_custom_call.1} parent=0
    _
  %s7 = ssub.s32 1, %s5
  %s8 = scalar_select 0, %s7, %s5
  $region1: #{tpu_custom_call.1} parent=0
    #allocation2 [shape = 'u8[2048]{0}', space=vmem, size = 0x800, scoped, tag = 'input window, operand 0, single buffered']
    #allocation3 [shape = 's32[1]{0}', space=sflag, size = 0x4, scoped, tag = 'scoped memory for tpu_custom_call.1']
    #allocation4 [shape = 's32[1]{0}', space=sflag, size = 0x4, scoped, tag = 'scoped memory for tpu_custom_call.1']
    #allocation5 [shape = 'u8[32768]{0}', space=vmem, size = 0x8000, scoped, tag = 'input window, operand 1, single buffered']
    #allocation6 [shape = 's32[1]{0}', space=sflag, size = 0x4, scoped, tag = 'scoped memory for tpu_custom_call.1']
    #allocation7 [shape = 'u8[4096]{0}', space=vmem, size = 0x1000, scoped, tag = 'output window, operand 0, single buffered']
    %9 = vsyncpa [#allocation3], 0
    %10 = vsyncpa [#allocation6], 0
    %11 = vsyncpa [#allocation4], 0
    // Predicated region
    $region2: #{tpu_custom_call.1} parent=1 // pred_check
      _
    $region3: #{tpu_custom_call.1} parent=1 // pred_check_branch
      %13 = sbr.rel (0) target = $region5
    $region4: #{tpu_custom_call.1} parent=1 // pred_region
      %s15 = ssub.s32 64, 64
      %16 = vsyncadd [#allocation3], %s15
      %s18 = sshll.u32 [#allocation2], 4
      %s19 = int_to_ptr.vmem [resolvable:$true] %s18
      %21 = dma.hbm_to_vmem [thread:$0]  %s0, 64, %s19, [#allocation3]
    $region5: #{tpu_custom_call.1} parent=1 // pred_fallthru
      _
    // Predicated region
    $region6: #{tpu_custom_call.1} parent=1 // pred_check
      _
    $region7: #{tpu_custom_call.1} parent=1 // pred_check_branch
      %23 = sbr.rel (0) target = $region9
    $region8: #{tpu_custom_call.1} parent=1 // pred_region
      %s25 = ssub.s32 1024, 1024
      %26 = vsyncadd [#allocation6], %s25
      %s27 = sshll.u32 [#allocation5], 4
      %s28 = int_to_ptr.vmem [resolvable:$true] %s27
      %33 = dma.hbm_to_vmem [thread:$0]  %s1, 1024, %s28, [#allocation6], 64, 64, 4
    $region9: #{tpu_custom_call.1} parent=1 // pred_fallthru
      _
    // Predicated region
    $region10: #{tpu_custom_call.1} parent=1 // pred_check
      _
    $region11: #{tpu_custom_call.1} parent=1 // pred_check_branch
      %35 = sbr.rel (0) target = $region13
    $region12: #{tpu_custom_call.1} parent=1 // pred_region
      _
    $region13: #{tpu_custom_call.1} parent=1 // pred_fallthru
      _
    // Predicated region
    $region14: #{tpu_custom_call.1} parent=1 // pred_check
      _
    $region15: #{tpu_custom_call.1} parent=1 // pred_check_branch
      %37 = sbr.rel (0) target = $region17
    $region16: #{tpu_custom_call.1} parent=1 // pred_region
      _
    $region17: #{tpu_custom_call.1} parent=1 // pred_fallthru
      _
    // Predicated region
    $region18: #{tpu_custom_call.1} parent=1 // pred_check
      _
    $region19: #{tpu_custom_call.1} parent=1 // pred_check_branch
      %39 = sbr.rel (0) target = $region21
    $region20: #{tpu_custom_call.1} parent=1 // pred_region
      %40 = dma.done [#allocation3], 64
    $region21: #{tpu_custom_call.1} parent=1 // pred_fallthru
      _
    // Predicated region
    $region22: #{tpu_custom_call.1} parent=1 // pred_check
      _
    $region23: #{tpu_custom_call.1} parent=1 // pred_check_branch
      %42 = sbr.rel (0) target = $region25
    $region24: #{tpu_custom_call.1} parent=1 // pred_region
      %43 = dma.done [#allocation6], 1024
    $region25: #{tpu_custom_call.1} parent=1 // pred_fallthru
      _
    %s45 = smul.u32 0, 128
    %s46 = sshra.s32 %s45, 7
    %s47 = sand.u32 %s45, 127
    %s48 = smul.addr %s46, 4
    %s49 = scalar_lea.vmem [#allocation2], %s48
    %v50 = vld [vmem:[%s49] sm:$0xf]
    %v51 = vld [vmem:[#allocation5] sm:$0xf]
    %v52 = vld [vmem:[#allocation5 + $0x4] sm:$0xf]
    %v53 = vld [vmem:[#allocation5 + $0x8] sm:$0xf]
    %v54 = vld [vmem:[#allocation5 + $0xc] sm:$0xf]
    %v55 = vld [vmem:[#allocation5 + $0x10] sm:$0xf]
    %v56 = vld [vmem:[#allocation5 + $0x14] sm:$0xf]
    %v57 = vld [vmem:[#allocation5 + $0x18] sm:$0xf]
    %v58 = vld [vmem:[#allocation5 + $0x1c] sm:$0xf]
    %v59 = vld [vmem:[#allocation5 + $0x20] sm:$0xf]
    %v60 = vld [vmem:[#allocation5 + $0x24] sm:$0xf]
    %v61 = vld [vmem:[#allocation5 + $0x28] sm:$0xf]
    %v62 = vld [vmem:[#allocation5 + $0x2c] sm:$0xf]
    %v63 = vld [vmem:[#allocation5 + $0x30] sm:$0xf]
    %v64 = vld [vmem:[#allocation5 + $0x34] sm:$0xf]
    %v65 = vld [vmem:[#allocation5 + $0x38] sm:$0xf]
    %v66 = vld [vmem:[#allocation5 + $0x3c] sm:$0xf]
    %v83 = vunpack.c.l.b16 %v51
    %v84 = vunpack.c.l.b16 %v52
    %v85 = vunpack.c.l.b16 %v53
    %v86 = vunpack.c.l.b16 %v54
    %v87 = vunpack.c.l.b16 %v55
    %v88 = vunpack.c.l.b16 %v56
    %v89 = vunpack.c.l.b16 %v57
    %v90 = vunpack.c.l.b16 %v58
    %v91 = vunpack.c.l.b16 %v59
    %v92 = vunpack.c.l.b16 %v60
    %v93 = vunpack.c.l.b16 %v61
    %v94 = vunpack.c.l.b16 %v62
    %v95 = vunpack.c.l.b16 %v63
    %v96 = vunpack.c.l.b16 %v64
    %v97 = vunpack.c.l.b16 %v65
    %v98 = vunpack.c.l.b16 %v66
    %v99 = vpack.c.b16 %v84, %v83
    %v100 = vpack.c.b16 %v86, %v85
    %v101 = vpack.c.b16 %v88, %v87
    %v102 = vpack.c.b16 %v90, %v89
    %v103 = vpack.c.b16 %v92, %v91
    %v104 = vpack.c.b16 %v94, %v93
    %v105 = vpack.c.b16 %v96, %v95
    %v106 = vpack.c.b16 %v98, %v97
    %115 = vmatprep.subr.bf16.mxu0 0
    %116 = vmatpush1.bf16.msra.mxu0 %v106
    %117 = vmatprep.subr.bf16.mxu0 0
    %118 = vmatpush1.bf16.msra.mxu0 %v105
    %119 = vmatprep.subr.bf16.mxu0 0
    %120 = vmatpush1.bf16.msra.mxu0 %v104
    %121 = vmatprep.subr.bf16.mxu0 0
    %122 = vmatpush1.bf16.msra.mxu0 %v103
    %123 = vmatprep.subr.bf16.mxu0 0
    %124 = vmatpush1.bf16.msra.mxu0 %v102
    %125 = vmatprep.subr.bf16.mxu0 0
    %126 = vmatpush1.bf16.msra.mxu0 %v101
    %127 = vmatprep.subr.bf16.mxu0 0
    %128 = vmatpush1.bf16.msra.mxu0 %v100
    %129 = vmatprep.subr.bf16.mxu0 0
    %130 = vmatpush1.bf16.msra.mxu0 %v99
    %131 = vmatprep.subr.bf16.mxu0 0
    %132 = vmatpush2.bf16.msra.mxu0 0
    %133 = vmatprep.subr.bf16.mxu0 0
    %134 = vmatpush2.bf16.msra.mxu0 0
    %135 = vmatprep.subr.bf16.mxu0 0
    %136 = vmatpush2.bf16.msra.mxu0 0
    %137 = vmatprep.subr.bf16.mxu0 0
    %138 = vmatpush2.bf16.msra.mxu0 0
    %139 = vmatprep.subr.bf16.mxu0 0
    %140 = vmatpush2.bf16.msra.mxu0 0
    %141 = vmatprep.subr.bf16.mxu0 0
    %142 = vmatpush2.bf16.msra.mxu0 0
    %143 = vmatprep.subr.bf16.mxu0 0
    %144 = vmatpush2.bf16.msra.mxu0 0
    %145 = vmatprep.subr.bf16.mxu0 0
    %146 = vmatpush2.bf16.msra.mxu0 0
    %147 = vmatprep.mubr.bf16.mxu0 0
    %148 = vmatmul.mubr.bf16.gmra.mxu0 %v50
    %v149 = vpop.f32.mrf.mxu0
    %v150 = vadd.f32 0.0, %v149
    %v151 = vpop.f32.mrf.mxu0
    %v152 = vpop.f32.mrf.mxu0
    %v153 = vpop.f32.mrf.mxu0
    %154 = vdwg.mxu0
    %p155 = scmp.eq.s32.totalorder 0, 0
    // Predicated region
    $region26: #{tpu_custom_call.1} parent=1 // pred_check
      %p156 = pneg %p155
    $region27: #{tpu_custom_call.1} parent=1 // pred_check_branch
      %158 = sbr.rel (%p156) target = $region29
    $region28: #{tpu_custom_call.1} parent=1 // pred_region
      %159 = vst [vmem:[#allocation7] sm:$0xff] %v150
    $region29: #{tpu_custom_call.1} parent=1 // pred_fallthru
      _
    %p160 = scmp.gt.s32.totalorder 0, 0
    // Predicated region
    $region30: #{tpu_custom_call.1} parent=1 // pred_check
      %p161 = pneg %p160
    $region31: #{tpu_custom_call.1} parent=1 // pred_check_branch
      %163 = sbr.rel (%p161) target = $region33
    $region32: #{tpu_custom_call.1} parent=1 // pred_region
      %v164 = vld [vmem:[#allocation7] sm:$0xff]
      %v165 = vadd.f32 %v164, %v150
      %166 = vst [vmem:[#allocation7] sm:$0xff] %v165
    $region33: #{tpu_custom_call.1} parent=1 // pred_fallthru
      _
    // Predicated region
    $region34: #{tpu_custom_call.1} parent=1 // pred_check
      %p167 = pneg %p155
    $region35: #{tpu_custom_call.1} parent=1 // pred_check_branch
      %169 = sbr.rel (%p167) target = $region37
    $region36: #{tpu_custom_call.1} parent=1 // pred_region
      %v170 = vld [vmem:[#allocation7] sm:$0xff]
      %v171 = vrot.slane %v170, 4
      %v172 = vadd.f32 %v170, %v171
      %v173 = vrot.slane %v172, 2
      %v174 = vadd.f32 %v172, %v173
      %v175 = vrot.slane %v174, 1
      %v176 = vadd.f32 %v174, %v175
      %v177 = vrcp.pop 8.0
      %v178 = vmul.f32 %v176, %v177
      %v179 = vsub.f32 %v170, %v178
      %v180 = vmul.f32 %v179, %v179
      %v181 = vrot.slane %v180, 4
      %v182 = vadd.f32 %v180, %v181
      %v183 = vrot.slane %v182, 2
      %v184 = vadd.f32 %v182, %v183
      %v185 = vrot.slane %v184, 1
      %v186 = vadd.f32 %v184, %v185
      %v187 = vmul.f32 %v186, %v177
      %v188 = vld [vmem:[%s2] sm:$0x1]
      %v189 = vadd.f32 %v187, 1e-05
      %v190 = vrsqrt.pop %v189
      %v191 = vmul.f32 %v188, %v190
      %v193 = vlaneseq
      %v194 = vshrl.u32 %v193, 7
      %v195 = vsub.s32 0, %v194
      %v196 = vrot.slane %v191, %v195
      %v198 = vmul.f32 %v179, %v196
      %v199 = vld [vmem:[%s3] sm:$0x1]
      %v201 = vlaneseq
      %v202 = vshrl.u32 %v201, 7
      %v203 = vsub.s32 0, %v202
      %v204 = vrot.slane %v199, %v203
      %v206 = vadd.f32 %v198, %v204
      %207 = vst [vmem:[#allocation7] sm:$0xff] %v206
    $region37: #{tpu_custom_call.1} parent=1 // pred_fallthru
      _
    // Predicated region
    $region38: #{tpu_custom_call.1} parent=1 // pred_check
      _
    $region39: #{tpu_custom_call.1} parent=1 // pred_check_branch
      %209 = sbr.rel (0) target = $region41
    $region40: #{tpu_custom_call.1} parent=1 // pred_region
      %s211 = ssub.s32 128, 128
      %212 = vsyncadd [#allocation4], %s211
      %s214 = sshll.u32 [#allocation7], 4
      %s215 = int_to_ptr.vmem [resolvable:$true] %s214
      %217 = dma.vmem_to_hbm [thread:$0]  %s215, 128, %s4, [#allocation4]
    $region41: #{tpu_custom_call.1} parent=1 // pred_fallthru
      _
    // Predicated region
    $region42: #{tpu_custom_call.1} parent=1 // pred_check
      _
    $region43: #{tpu_custom_call.1} parent=1 // pred_check_branch
      %219 = sbr.rel (0) target = $region45
    $region44: #{tpu_custom_call.1} parent=1 // pred_region
      %220 = dma.done [#allocation4], 128
    $region45: #{tpu_custom_call.1} parent=1 // pred_fallthru
      _
    %221 = vsyncpa [#allocation3], 1
    %222 = vsyncpa [#allocation6], 1
    %223 = vsyncpa [#allocation4], 1

</llo_original>
